<compile_context>
chip_gen: v7x
topology: tpu7x:2x2x1
jax: 0.10.0
libtpu: 0.0.40
codegen_flags: <defaults>
</compile_context>

<pallas_src>
import jax
import jax.numpy as jnp
from jax import lax
from jax.experimental import pallas as pl
from jax.experimental.pallas import tpu as pltpu


def _round_up(x, m):
    return ((x + m - 1) // m) * m


# ----------------------------------------------------------------------------
# One-time parameter / geometry preparation (hoisted out of the forward path).
# ----------------------------------------------------------------------------
def prepare_dilated_block(params, dilation_values, padding_values,
                          input_height, input_width):
    """Precompute static geometry + stacked banded bf16 weights per layer.

    Banded matrix rows are indexed (ki, w_in, ci) and columns (w_out, co):
      Wb[ki*Win*Cin + w_in*Cin + ci, w_out*Cout + co] = W[co, ci, ki, kj]
    whenever w_in == w_out + kj*dilation - padding lies in [0, Win), so the
    W-direction taps and W-direction zero padding live in the contraction.
    """
    Cout, Cin0, K, _ = params[0][0].shape
    cfgs = []
    prepped = []
    Hin, Win, Cin = input_height, input_width, Cin0
    out_hw = None
    for (w, b), dil, pad in zip(params, dilation_values, padding_values):
        Ho_i = Hin + 2 * pad - dil * (K - 1)
        Wo_i = Win + 2 * pad - dil * (K - 1)
        if out_hw is None:
            out_hw = (Ho_i, Wo_i)
        assert (Ho_i, Wo_i) == out_hw, \
            "torch.cat in the reference forward requires equal spatial dims"
        cfgs.append(dict(pad=pad, dil=dil, Hin=Hin, Win=Win, Cin=Cin))
        Hin, Win, Cin = Ho_i, Wo_i, Cout
    Ho, Wo = out_hw

    for cfg, (w, b) in zip(cfgs, params):
        Win_i, Cin_i, pad, dil = cfg["Win"], cfg["Cin"], cfg["pad"], cfg["dil"]
        mats = []
        for ki in range(K):
            Bm = jnp.zeros((Win_i * Cin_i, Wo * Cout), jnp.float32)
            for kj in range(K):
                band = jnp.eye(Win_i, Wo, k=pad - kj * dil, dtype=jnp.float32)
                Bm = Bm + jnp.kron(band, w[:, :, ki, kj].T.astype(jnp.float32))
            mats.append(Bm)
        # Stack the K taps along the contraction -> one deep matmul per layer.
        w_stacked = jnp.concatenate(mats, axis=0).astype(jnp.bfloat16)
        b_flat = jnp.tile(b.astype(jnp.float32), Wo).reshape(1, Wo * Cout)
        prepped.append((w_stacked, b_flat))

    return dict(cfgs=cfgs, prepped=prepped, K=K, Cout=Cout, Cin0=Cin0,
                Ho=Ho, Wo=Wo, H=input_height, W=input_width)


# ----------------------------------------------------------------------------
# Fused Pallas kernel: all dilated-conv + LeakyReLU layers for one batch tile.
# ----------------------------------------------------------------------------
def _make_fused_kernel(cfgs, K, Cout, Ho, Wo, lrelu_a, b_tile, h_buf, wc_buf):
    n_layers = len(cfgs)
    WoC = Wo * Cout
    M = b_tile * Ho

    def kernel(*refs):
        x_ref = refs[0]                                        # (b_tile, H0, W0*Cin0)
        w_refs = [refs[1 + 2 * i] for i in range(n_layers)]    # (K*W*Cin, Wo*Cout) bf16
        b_refs = [refs[2 + 2 * i] for i in range(n_layers)]    # (1, Wo*Cout) f32
        out_ref = refs[1 + 2 * n_layers]                       # (b_tile, Ho, Wo*Cout)
        pad_ref = refs[2 + 2 * n_layers]                       # VMEM bf16 scratch

        act = x_ref[...].astype(jnp.bfloat16)                  # layer-0 input
        total = None                                           # f32 running sum

        for i, cfg in enumerate(cfgs):
            pad, dil = cfg["pad"], cfg["dil"]
            Hin, WC = cfg["Hin"], cfg["Win"] * cfg["Cin"]

            # Halo-only zeroing: rows [0, pad) and [pad+Hin, Hin+2*pad).
            # Interior rows are fully overwritten below; lanes >= WC are never
            # read, so zeroing the full lane width here is harmless and keeps
            # the stores unmasked along lanes.  (roff == pad, so the ki=0 tap
            # read starts at row 0 == sublane-aligned.)
            if pad > 0:
                zer = jnp.zeros((b_tile, pad, wc_buf), jnp.bfloat16)
                pad_ref[:, 0:pad, :] = zer
                pad_ref[:, pad + Hin:pad + Hin + pad, :] = zer
            pad_ref[:, pad:pad + Hin, 0:WC] = act              # interior

            # im2row over the K H-direction taps -> one deep MXU contraction.
            taps = [pad_ref[:, ki * dil:ki * dil + Ho, 0:WC] for ki in range(K)]
            lhs = jnp.concatenate(taps, axis=-1).reshape(M, K * WC)   # bf16
            y = jnp.dot(lhs, w_refs[i][...],
                        preferred_element_type=jnp.float32)           # (M, WoC)
            y = y + b_refs[i][...]                                     # f32 bias

            # y + leaky_relu(y) == where(y > 0, 2, 1 + a) * y
            contrib = jnp.where(y > 0.0, 2.0, 1.0 + lrelu_a) * y
            total = contrib if total is None else total + contrib

            if i + 1 < n_layers:                                # next layer input
                z = jnp.where(y > 0.0, y, lrelu_a * y)
                act = z.astype(jnp.bfloat16).reshape(b_tile, Ho, WoC)

        out_ref[...] = total.reshape(b_tile, Ho, WoC).astype(out_ref.dtype)

    return kernel


# ----------------------------------------------------------------------------
# Full dilated_block forward (defaults: no batchnorm, no dropout, stride=1).
# ----------------------------------------------------------------------------
def dilated_block_forward(x_nchw, block, lrelu_a=0.01, target_mxu_rows=256):
    cfgs, prepped = block["cfgs"], block["prepped"]
    K, Cout, Cin0 = block["K"], block["Cout"], block["Cin0"]
    Ho, Wo, H, W = block["Ho"], block["Wo"], block["H"], block["W"]
    N = x_nchw.shape[0]
    assert x_nchw.shape == (N, Cin0, H, W)

    # Batch tiling: grow the MXU M dimension to ~target_mxu_rows per grid step.
    cap = max(1, target_mxu_rows // Ho)
    b_tile = max(d for d in range(1, N + 1) if N % d == 0 and d <= cap)
    # TODO(synk): on v7x (2 TensorCores) prefer keeping >= 2 parallel grid
    # steps and add a row-band grid axis (halo = sum_i dil_i*(K-1)) for large
    # images so scratch + activations stay under its 64 MiB VMEM.

    # Glue: NCHW -> flattened channels-last rows (N, H, W*Cin0).
    x_flat = jnp.transpose(x_nchw, (0, 2, 3, 1)).reshape(N, H, W * Cin0)

    h_buf = _round_up(max(c["Hin"] + 2 * c["pad"] for c in cfgs), 16)
    wc_buf = _round_up(max(c["Win"] * c["Cin"] for c in cfgs), 128)

    in_specs = [pl.BlockSpec((b_tile, H, W * Cin0), lambda n: (n, 0, 0))]
    w_args = []
    for (wb, bf) in prepped:          # weights VMEM-resident (constant index map)
        w_args += [wb, bf]
        in_specs.append(pl.BlockSpec(wb.shape, lambda n: (0, 0)))
        in_specs.append(pl.BlockSpec(bf.shape, lambda n: (0, 0)))

    kernel = _make_fused_kernel(cfgs, K, Cout, Ho, Wo, lrelu_a,
                                b_tile, h_buf, wc_buf)

    out_flat = pl.pallas_call(
        kernel,
        out_shape=jax.ShapeDtypeStruct((N, Ho, Wo * Cout), x_nchw.dtype),
        grid=(N // b_tile,),
        in_specs=in_specs,
        out_specs=pl.BlockSpec((b_tile, Ho, Wo * Cout), lambda n: (n, 0, 0)),
        scratch_shapes=[pltpu.VMEM((b_tile, h_buf, wc_buf), jnp.bfloat16)],
        compiler_params=pltpu.CompilerParams(dimension_semantics=("parallel",)),
        # NOTE: demo shapes fit the default scoped VMEM; set vmem_limit_bytes
        # once banded weights + band scratch outgrow it.
    )(x_flat, *w_args)

    # Glue back to the PyTorch NCHW layout.
    # TODO(synk): emit channels-last directly when the surrounding model allows
    # (saves this transpose's extra HBM read+write pass).
    out = out_flat.reshape(N, Ho, Wo, Cout)
    return jnp.transpose(out, (0, 3, 1, 2))


# Pure-JAX reference (correctness check only, f32).
def _reference_forward(x_nchw, params, dilation_values, padding_values,
                       lrelu_a=0.01):
    x = x_nchw
    total = 0.0
    for (w, b), dil, pad in zip(params, dilation_values, padding_values):
        y = lax.conv_general_dilated(
            x, w, window_strides=(1, 1), padding=[(pad, pad), (pad, pad)],
            rhs_dilation=(dil, dil),
            dimension_numbers=("NCHW", "OIHW", "NCHW"))
        y = y + b[None, :, None, None]
        z = jnp.where(y > 0, y, lrelu_a * y)
        total = total + y + z
        x = z
    return total


def init_params(key, input_channels, output_channels, dilation_values,
                kernel_size=3):
    """Deterministic synthetic Conv2d weights/biases (PyTorch OIHW layout)."""
    params = []
    cin = input_channels
    for _ in dilation_values:
        key, kw, kb = jax.random.split(key, 3)
        w = 0.1 * jax.random.normal(
            kw, (output_channels, cin, kernel_size, kernel_size), jnp.float32)
        b = 0.1 * jax.random.normal(kb, (output_channels,), jnp.float32)
        params.append((w, b))
        cin = output_channels
    return params


if __name__ == "__main__":
    # Module config (use_batchnorm=False, dropout_=0, stride=1 defaults).
    input_channels = 4
    output_channels = 8
    dilation_values = [2, 4]
    padding_values = [2, 4]     # preserves spatial size with kernel_size=3
    kernel_size = 3
    lrelu_a = 0.01

    key = jax.random.PRNGKey(0)
    key, kx = jax.random.split(key)
    x = jax.random.normal(kx, (2, input_channels, 16, 16), jnp.float32)  # NCHW

    params = init_params(key, input_channels, output_channels,
                         dilation_values, kernel_size)

    # One-time preprocessing (banded bf16 weights, tiled biases, geometry).
    block = prepare_dilated_block(params, dilation_values, padding_values,
                                  input_height=16, input_width=16)

    out = dilated_block_forward(x, block, lrelu_a=lrelu_a)
    out = jax.block_until_ready(out)

    ref = _reference_forward(x, params, dilation_values, padding_values,
                             lrelu_a=lrelu_a)
    assert out.shape == (2, output_channels, 16, 16), out.shape
    # bf16 matmul operands (f32 accumulation) -> loosened tolerance vs f32 ref.
    max_err = float(jnp.max(jnp.abs(out - ref)))
    assert jnp.allclose(out, ref, atol=3e-2, rtol=3e-2), f"mismatch: {max_err}"

    print("KERNEL_OK")
</pallas_src>

<mosaic_0001>
module attributes {stable_mosaic.version = 11 : i64} {
  func.func @kernel(%arg0: i32, %arg1: memref<2x16x64xf32, #tpu.memory_space<vmem>>, %arg2: memref<192x128xbf16, #tpu.memory_space<vmem>>, %arg3: memref<1x128xf32, #tpu.memory_space<vmem>>, %arg4: memref<384x128xbf16, #tpu.memory_space<vmem>>, %arg5: memref<1x128xf32, #tpu.memory_space<vmem>>, %arg6: memref<2x16x128xf32, #tpu.memory_space<vmem>>, %arg7: memref<2x32x128xbf16, #tpu.memory_space<vmem>>) attributes {dimension_semantics = [#tpu.dimension_semantics<parallel>], iteration_bounds = array<i64: 1>, scalar_prefetch = 0 : i64, scratch_operands = 1 : i64, tpu.core_type = #tpu.core_type<tc>, window_params = [{transform_indices = @transform_0, window_bounds = array<i64: 2, 16, 64>}, {pipeline_mode = #tpu.pipeline_mode<synchronous>, transform_indices = @transform_1, window_bounds = array<i64: 192, 128>}, {pipeline_mode = #tpu.pipeline_mode<synchronous>, transform_indices = @transform_2, window_bounds = array<i64: 1, 128>}, {pipeline_mode = #tpu.pipeline_mode<synchronous>, transform_indices = @transform_3, window_bounds = array<i64: 384, 128>}, {pipeline_mode = #tpu.pipeline_mode<synchronous>, transform_indices = @transform_4, window_bounds = array<i64: 1, 128>}, {transform_indices = @transform_5, window_bounds = array<i64: 2, 16, 128>}]} {
    %c0 = arith.constant 0 : index
    %c0_0 = arith.constant 0 : index
    %c0_1 = arith.constant 0 : index
    %0 = vector.load %arg1[%c0, %c0_0, %c0_1] : memref<2x16x64xf32, #tpu.memory_space<vmem>>, vector<2x16x64xf32>
    %1 = arith.truncf %0 : vector<2x16x64xf32> to vector<2x16x64xbf16>
    %cst = arith.constant 0.000000e+00 : bf16
    %2 = vector.broadcast %cst : bf16 to vector<2x2x128xbf16>
    %c0_2 = arith.constant 0 : index
    %c0_3 = arith.constant 0 : index
    %c0_4 = arith.constant 0 : index
    %3 = vector.load %arg7[%c0_2, %c0_3, %c0_4] : memref<2x32x128xbf16, #tpu.memory_space<vmem>>, vector<2x2x128xbf16>
    tpu.vector_store %arg7[%c0_2, %c0_3, %c0_4], %2 {strides = array<i32>} : memref<2x32x128xbf16, #tpu.memory_space<vmem>>, vector<2x2x128xbf16>,
    %c0_5 = arith.constant 0 : index
    %c18 = arith.constant 18 : index
    %c0_6 = arith.constant 0 : index
    %4 = vector.load %arg7[%c0_5, %c18, %c0_6] : memref<2x32x128xbf16, #tpu.memory_space<vmem>>, vector<2x2x128xbf16>
    tpu.vector_store %arg7[%c0_5, %c18, %c0_6], %2 {strides = array<i32>} : memref<2x32x128xbf16, #tpu.memory_space<vmem>>, vector<2x2x128xbf16>,
    %c0_7 = arith.constant 0 : index
    %c2 = arith.constant 2 : index
    %c0_8 = arith.constant 0 : index
    %5 = vector.load %arg7[%c0_7, %c2, %c0_8] : memref<2x32x128xbf16, #tpu.memory_space<vmem>>, vector<2x16x64xbf16>
    tpu.vector_store %arg7[%c0_7, %c2, %c0_8], %1 {strides = array<i32>} : memref<2x32x128xbf16, #tpu.memory_space<vmem>>, vector<2x16x64xbf16>,
    %c0_9 = arith.constant 0 : index
    %c0_10 = arith.constant 0 : index
    %c0_11 = arith.constant 0 : index
    %6 = vector.load %arg7[%c0_9, %c0_10, %c0_11] : memref<2x32x128xbf16, #tpu.memory_space<vmem>>, vector<2x16x64xbf16>
    %c0_12 = arith.constant 0 : index
    %c2_13 = arith.constant 2 : index
    %c0_14 = arith.constant 0 : index
    %7 = vector.load %arg7[%c0_12, %c2_13, %c0_14] : memref<2x32x128xbf16, #tpu.memory_space<vmem>>, vector<2x16x64xbf16>
    %c0_15 = arith.constant 0 : index
    %c4 = arith.constant 4 : index
    %c0_16 = arith.constant 0 : index
    %8 = vector.load %arg7[%c0_15, %c4, %c0_16] : memref<2x32x128xbf16, #tpu.memory_space<vmem>>, vector<2x16x64xbf16>
    %9 = tpu.concatenate %6, %7, %8 in 2 : vector<2x16x64xbf16>, vector<2x16x64xbf16>, vector<2x16x64xbf16> -> vector<2x16x192xbf16>
    %10 = vector.shape_cast %9 : vector<2x16x192xbf16> to vector<32x192xbf16>
    %c0_17 = arith.constant 0 : index
    %c0_18 = arith.constant 0 : index
    %11 = vector.load %arg2[%c0_17, %c0_18] : memref<192x128xbf16, #tpu.memory_space<vmem>>, vector<192x128xbf16>
    %cst_19 = arith.constant dense<0.000000e+00> : vector<32x128xf32>
    %12 = tpu.matmul %10, %11, %cst_19 {dimension_numbers = #tpu.dot_dimension_numbers<[1], [0], [0], [1], [0, 0, 1, 1], [], []>} : vector<32x192xbf16>, vector<192x128xbf16>, vector<32x128xf32> -> vector<32x128xf32>
    %c0_20 = arith.constant 0 : index
    %c0_21 = arith.constant 0 : index
    %13 = vector.load %arg3[%c0_20, %c0_21] : memref<1x128xf32, #tpu.memory_space<vmem>>, vector<1x128xf32>
    %14 = vector.broadcast %13 : vector<1x128xf32> to vector<32x128xf32>
    %15 = arith.addf %12, %14 : vector<32x128xf32>
    %cst_22 = arith.constant 0.000000e+00 : f32
    %16 = vector.broadcast %cst_22 : f32 to vector<32x128xf32>
    %17 = arith.cmpf ogt, %15, %16 : vector<32x128xf32>
    %cst_23 = arith.constant 2.000000e+00 : f32
    %cst_24 = arith.constant 1.010000e+00 : f32
    %18 = vector.broadcast %cst_23 : f32 to vector<32x128xf32>
    %19 = vector.broadcast %cst_24 : f32 to vector<32x128xf32>
    %20 = arith.select %17, %18, %19 : vector<32x128xi1>, vector<32x128xf32>
    %21 = arith.mulf %20, %15 : vector<32x128xf32>
    %cst_25 = arith.constant 0.000000e+00 : f32
    %22 = vector.broadcast %cst_25 : f32 to vector<32x128xf32>
    %23 = arith.cmpf ogt, %15, %22 : vector<32x128xf32>
    %cst_26 = arith.constant 0.00999999977 : f32
    %24 = vector.broadcast %cst_26 : f32 to vector<32x128xf32>
    %25 = arith.mulf %24, %15 : vector<32x128xf32>
    %26 = arith.select %23, %15, %25 : vector<32x128xi1>, vector<32x128xf32>
    %27 = arith.truncf %26 : vector<32x128xf32> to vector<32x128xbf16>
    %28 = vector.shape_cast %27 : vector<32x128xbf16> to vector<2x16x128xbf16>
    %cst_27 = arith.constant 0.000000e+00 : bf16
    %29 = vector.broadcast %cst_27 : bf16 to vector<2x4x128xbf16>
    %c0_28 = arith.constant 0 : index
    %c0_29 = arith.constant 0 : index
    %c0_30 = arith.constant 0 : index
    %30 = vector.load %arg7[%c0_28, %c0_29, %c0_30] : memref<2x32x128xbf16, #tpu.memory_space<vmem>>, vector<2x4x128xbf16>
    tpu.vector_store %arg7[%c0_28, %c0_29, %c0_30], %29 {strides = array<i32>} : memref<2x32x128xbf16, #tpu.memory_space<vmem>>, vector<2x4x128xbf16>,
    %c0_31 = arith.constant 0 : index
    %c20 = arith.constant 20 : index
    %c0_32 = arith.constant 0 : index
    %31 = vector.load %arg7[%c0_31, %c20, %c0_32] : memref<2x32x128xbf16, #tpu.memory_space<vmem>>, vector<2x4x128xbf16>
    tpu.vector_store %arg7[%c0_31, %c20, %c0_32], %29 {strides = array<i32>} : memref<2x32x128xbf16, #tpu.memory_space<vmem>>, vector<2x4x128xbf16>,
    %c0_33 = arith.constant 0 : index
    %c4_34 = arith.constant 4 : index
    %c0_35 = arith.constant 0 : index
    %32 = vector.load %arg7[%c0_33, %c4_34, %c0_35] : memref<2x32x128xbf16, #tpu.memory_space<vmem>>, vector<2x16x128xbf16>
    tpu.vector_store %arg7[%c0_33, %c4_34, %c0_35], %28 {strides = array<i32>} : memref<2x32x128xbf16, #tpu.memory_space<vmem>>, vector<2x16x128xbf16>,
    %c0_36 = arith.constant 0 : index
    %c0_37 = arith.constant 0 : index
    %c0_38 = arith.constant 0 : index
    %33 = vector.load %arg7[%c0_36, %c0_37, %c0_38] : memref<2x32x128xbf16, #tpu.memory_space<vmem>>, vector<2x16x128xbf16>
    %c0_39 = arith.constant 0 : index
    %c4_40 = arith.constant 4 : index
    %c0_41 = arith.constant 0 : index
    %34 = vector.load %arg7[%c0_39, %c4_40, %c0_41] : memref<2x32x128xbf16, #tpu.memory_space<vmem>>, vector<2x16x128xbf16>
    %c0_42 = arith.constant 0 : index
    %c8 = arith.constant 8 : index
    %c0_43 = arith.constant 0 : index
    %35 = vector.load %arg7[%c0_42, %c8, %c0_43] : memref<2x32x128xbf16, #tpu.memory_space<vmem>>, vector<2x16x128xbf16>
    %36 = tpu.concatenate %33, %34, %35 in 2 : vector<2x16x128xbf16>, vector<2x16x128xbf16>, vector<2x16x128xbf16> -> vector<2x16x384xbf16>
    %37 = vector.shape_cast %36 : vector<2x16x384xbf16> to vector<32x384xbf16>
    %c0_44 = arith.constant 0 : index
    %c0_45 = arith.constant 0 : index
    %38 = vector.load %arg4[%c0_44, %c0_45] : memref<384x128xbf16, #tpu.memory_space<vmem>>, vector<384x128xbf16>
    %cst_46 = arith.constant dense<0.000000e+00> : vector<32x128xf32>
    %39 = tpu.matmul %37, %38, %cst_46 {dimension_numbers = #tpu.dot_dimension_numbers<[1], [0], [0], [1], [0, 0, 1, 1], [], []>} : vector<32x384xbf16>, vector<384x128xbf16>, vector<32x128xf32> -> vector<32x128xf32>
    %c0_47 = arith.constant 0 : index
    %c0_48 = arith.constant 0 : index
    %40 = vector.load %arg5[%c0_47, %c0_48] : memref<1x128xf32, #tpu.memory_space<vmem>>, vector<1x128xf32>
    %41 = vector.broadcast %40 : vector<1x128xf32> to vector<32x128xf32>
    %42 = arith.addf %39, %41 : vector<32x128xf32>
    %cst_49 = arith.constant 0.000000e+00 : f32
    %43 = vector.broadcast %cst_49 : f32 to vector<32x128xf32>
    %44 = arith.cmpf ogt, %42, %43 : vector<32x128xf32>
    %cst_50 = arith.constant 2.000000e+00 : f32
    %cst_51 = arith.constant 1.010000e+00 : f32
    %45 = vector.broadcast %cst_50 : f32 to vector<32x128xf32>
    %46 = vector.broadcast %cst_51 : f32 to vector<32x128xf32>
    %47 = arith.select %44, %45, %46 : vector<32x128xi1>, vector<32x128xf32>
    %48 = arith.mulf %47, %42 : vector<32x128xf32>
    %49 = arith.addf %21, %48 : vector<32x128xf32>
    %50 = vector.shape_cast %49 : vector<32x128xf32> to vector<2x16x128xf32>
    %c0_52 = arith.constant 0 : index
    %c0_53 = arith.constant 0 : index
    %c0_54 = arith.constant 0 : index
    %51 = vector.load %arg6[%c0_52, %c0_53, %c0_54] : memref<2x16x128xf32, #tpu.memory_space<vmem>>, vector<2x16x128xf32>
    tpu.vector_store %arg6[%c0_52, %c0_53, %c0_54], %50 {strides = array<i32>} : memref<2x16x128xf32, #tpu.memory_space<vmem>>, vector<2x16x128xf32>,
    return
  }
  func.func @transform_0(%arg0: i32) -> (i32, i32, i32) {
    %c0_i32 = arith.constant 0 : i32
    %c0_i32_0 = arith.constant 0 : i32
    %c0_i32_1 = arith.constant 0 : i32
    return %arg0, %c0_i32, %c0_i32_0 : i32, i32, i32
  }
  func.func @transform_1(%arg0: i32) -> (i32, i32) {
    %c0_i32 = arith.constant 0 : i32
    %c0_i32_0 = arith.constant 0 : i32
    %c0_i32_1 = arith.constant 0 : i32
    return %c0_i32, %c0_i32_0 : i32, i32
  }
  func.func @transform_2(%arg0: i32) -> (i32, i32) {
    %c0_i32 = arith.constant 0 : i32
    %c0_i32_0 = arith.constant 0 : i32
    %c0_i32_1 = arith.constant 0 : i32
    return %c0_i32, %c0_i32_0 : i32, i32
  }
  func.func @transform_3(%arg0: i32) -> (i32, i32) {
    %c0_i32 = arith.constant 0 : i32
    %c0_i32_0 = arith.constant 0 : i32
    %c0_i32_1 = arith.constant 0 : i32
    return %c0_i32, %c0_i32_0 : i32, i32
  }
  func.func @transform_4(%arg0: i32) -> (i32, i32) {
    %c0_i32 = arith.constant 0 : i32
    %c0_i32_0 = arith.constant 0 : i32
    %c0_i32_1 = arith.constant 0 : i32
    return %c0_i32, %c0_i32_0 : i32, i32
  }
  func.func @transform_5(%arg0: i32) -> (i32, i32, i32) {
    %c0_i32 = arith.constant 0 : i32
    %c0_i32_0 = arith.constant 0 : i32
    %c0_i32_1 = arith.constant 0 : i32
    return %arg0, %c0_i32, %c0_i32_0 : i32, i32, i32
  }
}

</mosaic_0001>

<llo_original>
// kernel: tpu_custom_call.1
$region0: #{tpu_custom_call.1}
  #allocation0 [shape = 'u32[]', space=smem, size = 0x4, offset = 0x4, fixed_abs, tag = 'smem constant byte address 0x4 - core index']
  #allocation1 [shape = 'u32[144,128]{1,0:T(1,128)}', space=vmem, size = 0x12000, scoped, tag = 'internal scratch']
  #allocation2 [shape = 'bf16[2,32,128]{2,1,0:T(16,128)(2,1)}', space=vmem, size = 0x4000, scoped, tag = 'scratch operand']
  %s0 = inlined_call_operand.hbm [shape: f32[2,16,64], index: 0, kind: input, shape index: {}]
  %s1 = inlined_call_operand.hbm [shape: bf16[192,128], index: 1, kind: input, shape index: {}]
  %s2 = inlined_call_operand.vmem [shape: f32[1,128], index: 2, kind: input, shape index: {}]
  %s3 = inlined_call_operand.hbm [shape: bf16[384,128], index: 3, kind: input, shape index: {}]
  %s4 = inlined_call_operand.vmem [shape: f32[1,128], index: 4, kind: input, shape index: {}]
  %s5 = inlined_call_operand.hbm [shape: f32[2,16,128], index: 5, kind: output, shape index: {}]
  %s6 = sld [smem:[#allocation0]]
  $region42: #{tpu_custom_call.1} parent=0
    _
  %s8 = ssub.s32 1, %s6
  %s9 = scalar_select 0, %s8, %s6
  $region1: #{tpu_custom_call.1} parent=0
    #allocation3 [shape = 'u8[16384]{0}', space=vmem, size = 0x4000, scoped, tag = 'input window, operand 0, single buffered']
    #allocation4 [shape = 's32[1]{0}', space=sflag, size = 0x4, scoped, tag = 'scoped memory for tpu_custom_call.1']
    #allocation5 [shape = 's32[1]{0}', space=sflag, size = 0x4, scoped, tag = 'scoped memory for tpu_custom_call.1']
    #allocation6 [shape = 'u8[49152]{0}', space=vmem, size = 0xc000, scoped, tag = 'input window, operand 1, single buffered']
    #allocation7 [shape = 's32[1]{0}', space=sflag, size = 0x4, scoped, tag = 'scoped memory for tpu_custom_call.1']
    #allocation8 [shape = 'u8[98304]{0}', space=vmem, size = 0x18000, scoped, tag = 'input window, operand 3, single buffered']
    #allocation9 [shape = 'u8[16384]{0}', space=vmem, size = 0x4000, scoped, tag = 'output window, operand 0, single buffered']
    %10 = vsyncpa [#allocation4], 0
    %11 = vsyncpa [#allocation7], 0
    %12 = vsyncpa [#allocation5], 0
    // Predicated region
    $region2: #{tpu_custom_call.1} parent=1 // pred_check
      _
    $region3: #{tpu_custom_call.1} parent=1 // pred_check_branch
      %14 = sbr.rel (0) target = $region5
    $region4: #{tpu_custom_call.1} parent=1 // pred_region
      %s16 = ssub.s32 512, 512
      %17 = vsyncadd [#allocation4], %s16
      %s18 = sshll.u32 [#allocation3], 4
      %s19 = int_to_ptr.vmem [resolvable:$true] %s18
      %24 = dma.hbm_to_vmem [thread:$0]  %s0, 512, %s19, [#allocation4], 128, 128, 8
    $region5: #{tpu_custom_call.1} parent=1 // pred_fallthru
      _
    // Predicated region
    $region6: #{tpu_custom_call.1} parent=1 // pred_check
      _
    $region7: #{tpu_custom_call.1} parent=1 // pred_check_branch
      %26 = sbr.rel (0) target = $region9
    $region8: #{tpu_custom_call.1} parent=1 // pred_region
      %s28 = ssub.s32 1536, 1536
      %29 = vsyncadd [#allocation7], %s28
      %s30 = sshll.u32 [#allocation6], 4
      %s31 = int_to_ptr.vmem [resolvable:$true] %s30
      %36 = dma.hbm_to_vmem [thread:$0]  %s1, 1536, %s31, [#allocation7], 64, 64, 4
    $region9: #{tpu_custom_call.1} parent=1 // pred_fallthru
      _
    // Predicated region
    $region10: #{tpu_custom_call.1} parent=1 // pred_check
      _
    $region11: #{tpu_custom_call.1} parent=1 // pred_check_branch
      %38 = sbr.rel (0) target = $region13
    $region12: #{tpu_custom_call.1} parent=1 // pred_region
      _
    $region13: #{tpu_custom_call.1} parent=1 // pred_fallthru
      _
    // Predicated region
    $region14: #{tpu_custom_call.1} parent=1 // pred_check
      _
    $region15: #{tpu_custom_call.1} parent=1 // pred_check_branch
      %40 = sbr.rel (0) target = $region17
    $region16: #{tpu_custom_call.1} parent=1 // pred_region
      %s42 = ssub.s32 3072, 3072
      %43 = vsyncadd [#allocation7], %s42
      %s44 = sshll.u32 [#allocation8], 4
      %s45 = int_to_ptr.vmem [resolvable:$true] %s44
      %50 = dma.hbm_to_vmem [thread:$0]  %s3, 3072, %s45, [#allocation7], 64, 64, 4
    $region17: #{tpu_custom_call.1} parent=1 // pred_fallthru
      _
    // Predicated region
    $region18: #{tpu_custom_call.1} parent=1 // pred_check
      _
    $region19: #{tpu_custom_call.1} parent=1 // pred_check_branch
      %52 = sbr.rel (0) target = $region21
    $region20: #{tpu_custom_call.1} parent=1 // pred_region
      _
    $region21: #{tpu_custom_call.1} parent=1 // pred_fallthru
      _
    // Predicated region
    $region22: #{tpu_custom_call.1} parent=1 // pred_check
      _
    $region23: #{tpu_custom_call.1} parent=1 // pred_check_branch
      %54 = sbr.rel (0) target = $region25
    $region24: #{tpu_custom_call.1} parent=1 // pred_region
      %55 = dma.done [#allocation4], 512
    $region25: #{tpu_custom_call.1} parent=1 // pred_fallthru
      _
    // Predicated region
    $region26: #{tpu_custom_call.1} parent=1 // pred_check
      _
    $region27: #{tpu_custom_call.1} parent=1 // pred_check_branch
      %57 = sbr.rel (0) target = $region29
    $region28: #{tpu_custom_call.1} parent=1 // pred_region
      %58 = dma.done [#allocation7], 1536
    $region29: #{tpu_custom_call.1} parent=1 // pred_fallthru
      _
    // Predicated region
    $region30: #{tpu_custom_call.1} parent=1 // pred_check
      _
    $region31: #{tpu_custom_call.1} parent=1 // pred_check_branch
      %60 = sbr.rel (0) target = $region33
    $region32: #{tpu_custom_call.1} parent=1 // pred_region
      %61 = dma.done [#allocation7], 3072
    $region33: #{tpu_custom_call.1} parent=1 // pred_fallthru
      _
    %v63 = vld [vmem:[#allocation3] sm:$0xff]
    %v64 = vld [vmem:[#allocation3 + $0x8] sm:$0xff]
    %v65 = vld [vmem:[#allocation3 + $0x10] sm:$0xff]
    %v66 = vld [vmem:[#allocation3 + $0x18] sm:$0xff]
    %v67 = vpack.c.bf16 %v64, %v63
    %v68 = vpack.c.bf16 %v66, %v65
    %69 = vst [vmem:[#allocation2] sm:$0x1] 0
    %70 = vst [vmem:[#allocation2 + $0x10] sm:$0x1] 0
    %71 = vst [vmem:[#allocation2 + $0x8] sm:$0x2] 0
    %72 = vst [vmem:[#allocation2 + $0x18] sm:$0x2] 0
    %v75 = vrot.slane %v67, 7
    %v76 = vrot.slane %v68, 7
    %vm79 = vcmask 523265
    %80 = vst.msk [vmem:[#allocation2] sm:$0xfe] %vm79, %v75
    %vm81 = vcmask 516096
    %82 = vst.msk [vmem:[#allocation2 + $0x8] sm:$0x1] %vm81, %v75
    %83 = vst.msk [vmem:[#allocation2 + $0x10] sm:$0xfe] %vm79, %v76
    %84 = vst.msk [vmem:[#allocation2 + $0x18] sm:$0x1] %vm81, %v76
    %v85 = vld [vmem:[#allocation2] sm:$0xff]
    %v86 = vld [vmem:[#allocation2 + $0x10] sm:$0xff]
    %v87 = vld [vmem:[#allocation2] sm:$0xfe]
    %v88 = vld [vmem:[#allocation2 + $0x8] sm:$0x1]
    %v89 = vld [vmem:[#allocation2 + $0x10] sm:$0xfe]
    %v90 = vld [vmem:[#allocation2 + $0x18] sm:$0x1]
    %v91 = vld [vmem:[#allocation2] sm:$0xfc]
    %v92 = vld [vmem:[#allocation2 + $0x8] sm:$0x3]
    %v93 = vld [vmem:[#allocation2 + $0x10] sm:$0xfc]
    %v94 = vld [vmem:[#allocation2 + $0x18] sm:$0x3]
    %vm99 = vcmask 1046528
    %v100 = vrot.slane %v87, 1
    %v101 = vrot.slane %v88, 1
    %v102 = vsel %vm99, %v100, %v101
    %v103 = vrot.slane %v89, 1
    %v104 = vrot.slane %v90, 1
    %v105 = vsel %vm99, %v103, %v104
    %106 = vrot.lane.b32.xlu0 %v102, 64
    %v107 = vpop.permute.xlu0 %106
    %108 = vrot.lane.b32.xlu0 %v105, 64
    %v109 = vpop.permute.xlu0 %108
    %vm114 = vcmask 1045504
    %v115 = vrot.slane %v91, 2
    %v116 = vrot.slane %v92, 2
    %v117 = vsel %vm114, %v115, %v116
    %v118 = vrot.slane %v93, 2
    %v119 = vrot.slane %v94, 2
    %v120 = vsel %vm114, %v118, %v119
    %vm121 = vcmask 523264
    %v124 = vsel %vm121, %v85, %v107
    %v128 = vsel %vm121, %v86, %v109
    %v130 = vld [vmem:[#allocation6] sm:$0xf]
    %v131 = vld [vmem:[#allocation6 + $0x4] sm:$0xf]
    %v132 = vld [vmem:[#allocation6 + $0x8] sm:$0xf]
    %v133 = vld [vmem:[#allocation6 + $0xc] sm:$0xf]
    %v134 = vld [vmem:[#allocation6 + $0x10] sm:$0xf]
    %v135 = vld [vmem:[#allocation6 + $0x14] sm:$0xf]
    %v136 = vld [vmem:[#allocation6 + $0x18] sm:$0xf]
    %v137 = vld [vmem:[#allocation6 + $0x1c] sm:$0xf]
    %v138 = vld [vmem:[#allocation6 + $0x20] sm:$0xf]
    %v139 = vld [vmem:[#allocation6 + $0x24] sm:$0xf]
    %v140 = vld [vmem:[#allocation6 + $0x28] sm:$0xf]
    %v141 = vld [vmem:[#allocation6 + $0x2c] sm:$0xf]
    %v142 = vld [vmem:[#allocation6 + $0x30] sm:$0xf]
    %v143 = vld [vmem:[#allocation6 + $0x34] sm:$0xf]
    %v144 = vld [vmem:[#allocation6 + $0x38] sm:$0xf]
    %v145 = vld [vmem:[#allocation6 + $0x3c] sm:$0xf]
    %v146 = vld [vmem:[#allocation6 + $0x40] sm:$0xf]
    %v147 = vld [vmem:[#allocation6 + $0x44] sm:$0xf]
    %v148 = vld [vmem:[#allocation6 + $0x48] sm:$0xf]
    %v149 = vld [vmem:[#allocation6 + $0x4c] sm:$0xf]
    %v150 = vld [vmem:[#allocation6 + $0x50] sm:$0xf]
    %v151 = vld [vmem:[#allocation6 + $0x54] sm:$0xf]
    %v152 = vld [vmem:[#allocation6 + $0x58] sm:$0xf]
    %v153 = vld [vmem:[#allocation6 + $0x5c] sm:$0xf]
    %v154 = vld [vmem:[%s2] sm:$0x1]
    %v156 = vlaneseq
    %v157 = vshrl.u32 %v156, 7
    %v158 = vsub.s32 0, %v157
    %v159 = vrot.slane %v154, %v158
    %v185 = vunpack.c.l.b16 %v130
    %v186 = vunpack.c.l.b16 %v131
    %v187 = vunpack.c.l.b16 %v132
    %v188 = vunpack.c.l.b16 %v133
    %v189 = vunpack.c.l.b16 %v134
    %v190 = vunpack.c.l.b16 %v135
    %v191 = vunpack.c.l.b16 %v136
    %v192 = vunpack.c.l.b16 %v137
    %v193 = vunpack.c.l.b16 %v138
    %v194 = vunpack.c.l.b16 %v139
    %v195 = vunpack.c.l.b16 %v140
    %v196 = vunpack.c.l.b16 %v141
    %v197 = vunpack.c.l.b16 %v142
    %v198 = vunpack.c.l.b16 %v143
    %v199 = vunpack.c.l.b16 %v144
    %v200 = vunpack.c.l.b16 %v145
    %v201 = vunpack.c.l.b16 %v146
    %v202 = vunpack.c.l.b16 %v147
    %v203 = vunpack.c.l.b16 %v148
    %v204 = vunpack.c.l.b16 %v149
    %v205 = vunpack.c.l.b16 %v150
    %v206 = vunpack.c.l.b16 %v151
    %v207 = vunpack.c.l.b16 %v152
    %v208 = vunpack.c.l.b16 %v153
    %v209 = vpack.c.b16 %v186, %v185
    %v210 = vpack.c.b16 %v188, %v187
    %v211 = vpack.c.b16 %v190, %v189
    %v212 = vpack.c.b16 %v192, %v191
    %v213 = vpack.c.b16 %v194, %v193
    %v214 = vpack.c.b16 %v196, %v195
    %v215 = vpack.c.b16 %v198, %v197
    %v216 = vpack.c.b16 %v200, %v199
    %v217 = vpack.c.b16 %v202, %v201
    %v218 = vpack.c.b16 %v204, %v203
    %v219 = vpack.c.b16 %v206, %v205
    %v220 = vpack.c.b16 %v208, %v207
    %v234 = vsel %vm121, %v117, 0
    %v237 = vsel %vm121, %v120, 0
    %239 = vmatprep.subr.bf16.mxu0 0
    %240 = vmatpush1.bf16.msra.mxu0 %v209
    %241 = vmatprep.subr.bf16.mxu0 0
    %242 = vmatpush1.bf16.msra.mxu0 %v210
    %243 = vmatprep.subr.bf16.mxu0 0
    %244 = vmatpush1.bf16.msra.mxu0 %v211
    %245 = vmatprep.subr.bf16.mxu0 0
    %246 = vmatpush1.bf16.msra.mxu0 %v212
    %247 = vmatprep.subr.bf16.mxu0 0
    %248 = vmatpush1.bf16.msra.mxu0 %v213
    %249 = vmatprep.subr.bf16.mxu0 0
    %250 = vmatpush1.bf16.msra.mxu0 %v214
    %251 = vmatprep.subr.bf16.mxu0 0
    %252 = vmatpush1.bf16.msra.mxu0 %v215
    %253 = vmatprep.subr.bf16.mxu0 0
    %254 = vmatpush1.bf16.msra.mxu0 %v216
    %255 = vmatprep.subr.bf16.mxu0 0
    %256 = vmatpush1.bf16.msra.mxu0 %v217
    %257 = vmatprep.subr.bf16.mxu0 0
    %258 = vmatpush1.bf16.msra.mxu0 %v218
    %259 = vmatprep.subr.bf16.mxu0 0
    %260 = vmatpush1.bf16.msra.mxu0 %v219
    %261 = vmatprep.subr.bf16.mxu0 0
    %262 = vmatpush1.bf16.msra.mxu0 %v220
    %263 = vmatprep.subr.bf16.mxu0 0
    %264 = vmatpush1.bf16.msra.mxu0 0
    %265 = vmatprep.subr.bf16.mxu0 0
    %266 = vmatpush1.bf16.msra.mxu0 0
    %267 = vmatprep.subr.bf16.mxu0 0
    %268 = vmatpush1.bf16.msra.mxu0 0
    %269 = vmatprep.subr.bf16.mxu0 0
    %270 = vmatpush1.bf16.msra.mxu0 0
    %271 = vmatprep.mubr.bf16.mxu0 %v234
    %272 = vmatmul.mubr.bf16.gmra.mrb[0].mxu0 %v124
    %v273 = vpop.f32.mrb[0].mxu0
    %v274 = vadd.f32 %v159, %v273
    %v275 = vpop.f32.mrb[0].mxu0
    %v276 = vpop.f32.mrb[0].mxu0
    %v277 = vadd.f32 %v159, %v276
    %v278 = vpop.f32.mrb[0].mxu0
    %279 = vmatprep.mubr.bf16.mxu0 %v237
    %280 = vmatmul.mubr.bf16.gmra.mrb[0].mxu0 %v128
    %v281 = vpop.f32.mrb[0].mxu0
    %v282 = vadd.f32 %v159, %v281
    %v283 = vpop.f32.mrb[0].mxu0
    %v284 = vpop.f32.mrb[0].mxu0
    %v285 = vadd.f32 %v159, %v284
    %v286 = vpop.f32.mrb[0].mxu0
    %287 = vdwg.mxu0
    %vm288 = vcmp.gt.f32.partialorder %v274, 0.0
    %vm289 = vcmp.gt.f32.partialorder %v277, 0.0
    %vm290 = vcmp.gt.f32.partialorder %v282, 0.0
    %vm291 = vcmp.gt.f32.partialorder %v285, 0.0
    %v292 = vsel %vm288, 2.0, 1.01
    %v293 = vsel %vm289, 2.0, 1.01
    %v294 = vsel %vm290, 2.0, 1.01
    %v295 = vsel %vm291, 2.0, 1.01
    %v296 = vmul.f32 %v292, %v274
    %v297 = vmul.f32 %v293, %v277
    %v298 = vmul.f32 %v294, %v282
    %v299 = vmul.f32 %v295, %v285
    %v300 = vmul.f32 %v274, 0.01
    %v301 = vmul.f32 %v277, 0.01
    %v302 = vmul.f32 %v282, 0.01
    %v303 = vmul.f32 %v285, 0.01
    %v304 = vsel %vm288, %v274, %v300
    %v305 = vsel %vm289, %v277, %v301
    %v306 = vsel %vm290, %v282, %v302
    %v307 = vsel %vm291, %v285, %v303
    %v308 = vpack.c.bf16 %v305, %v304
    %v309 = vpack.c.bf16 %v307, %v306
    %310 = vst [vmem:[#allocation2] sm:$0x3] 0
    %311 = vst [vmem:[#allocation2 + $0x10] sm:$0x3] 0
    %312 = vst [vmem:[#allocation2 + $0x8] sm:$0xc] 0
    %313 = vst [vmem:[#allocation2 + $0x18] sm:$0xc] 0
    %v316 = vrot.slane %v308, 6
    %v317 = vrot.slane %v309, 6
    %320 = vst [vmem:[#allocation2] sm:$0xfc] %v316
    %321 = vst [vmem:[#allocation2 + $0x8] sm:$0x3] %v316
    %322 = vst [vmem:[#allocation2 + $0x10] sm:$0xfc] %v317
    %323 = vst [vmem:[#allocation2 + $0x18] sm:$0x3] %v317
    %v324 = vld [vmem:[#allocation2] sm:$0xff]
    %v325 = vld [vmem:[#allocation2 + $0x10] sm:$0xff]
    %v326 = vld [vmem:[#allocation2] sm:$0xfc]
    %v327 = vld [vmem:[#allocation2 + $0x8] sm:$0x3]
    %v328 = vld [vmem:[#allocation2 + $0x10] sm:$0xfc]
    %v329 = vld [vmem:[#allocation2 + $0x18] sm:$0x3]
    %v330 = vld [vmem:[#allocation2] sm:$0xf0]
    %v331 = vld [vmem:[#allocation2 + $0x8] sm:$0xf]
    %v332 = vld [vmem:[#allocation2 + $0x10] sm:$0xf0]
    %v333 = vld [vmem:[#allocation2 + $0x18] sm:$0xf]
    %v338 = vrot.slane %v326, 2
    %v339 = vrot.slane %v327, 2
    %v340 = vsel %vm114, %v338, %v339
    %v341 = vrot.slane %v328, 2
    %v342 = vrot.slane %v329, 2
    %v343 = vsel %vm114, %v341, %v342
    %vm350 = vcmask 1043456
    %v351 = vrot.slane %v330, 4
    %v352 = vrot.slane %v331, 4
    %v353 = vsel %vm350, %v351, %v352
    %v354 = vrot.slane %v332, 4
    %v355 = vrot.slane %v333, 4
    %v356 = vsel %vm350, %v354, %v355
    %v359 = vld [vmem:[#allocation8] sm:$0xf]
    %v360 = vld [vmem:[#allocation8 + $0x4] sm:$0xf]
    %v361 = vld [vmem:[#allocation8 + $0x8] sm:$0xf]
    %v362 = vld [vmem:[#allocation8 + $0xc] sm:$0xf]
    %v363 = vld [vmem:[#allocation8 + $0x10] sm:$0xf]
    %v364 = vld [vmem:[#allocation8 + $0x14] sm:$0xf]
    %v365 = vld [vmem:[#allocation8 + $0x18] sm:$0xf]
    %v366 = vld [vmem:[#allocation8 + $0x1c] sm:$0xf]
    %v367 = vld [vmem:[#allocation8 + $0x20] sm:$0xf]
    %v368 = vld [vmem:[#allocation8 + $0x24] sm:$0xf]
    %v369 = vld [vmem:[#allocation8 + $0x28] sm:$0xf]
    %v370 = vld [vmem:[#allocation8 + $0x2c] sm:$0xf]
    %v371 = vld [vmem:[#allocation8 + $0x30] sm:$0xf]
    %v372 = vld [vmem:[#allocation8 + $0x34] sm:$0xf]
    %v373 = vld [vmem:[#allocation8 + $0x38] sm:$0xf]
    %v374 = vld [vmem:[#allocation8 + $0x3c] sm:$0xf]
    %v375 = vld [vmem:[#allocation8 + $0x40] sm:$0xf]
    %v376 = vld [vmem:[#allocation8 + $0x44] sm:$0xf]
    %v377 = vld [vmem:[#allocation8 + $0x48] sm:$0xf]
    %v378 = vld [vmem:[#allocation8 + $0x4c] sm:$0xf]
    %v379 = vld [vmem:[#allocation8 + $0x50] sm:$0xf]
    %v380 = vld [vmem:[#allocation8 + $0x54] sm:$0xf]
    %v381 = vld [vmem:[#allocation8 + $0x58] sm:$0xf]
    %v382 = vld [vmem:[#allocation8 + $0x5c] sm:$0xf]
    %v383 = vld [vmem:[#allocation8 + $0x60] sm:$0xf]
    %v384 = vld [vmem:[#allocation8 + $0x64] sm:$0xf]
    %v385 = vld [vmem:[#allocation8 + $0x68] sm:$0xf]
    %v386 = vld [vmem:[#allocation8 + $0x6c] sm:$0xf]
    %v387 = vld [vmem:[#allocation8 + $0x70] sm:$0xf]
    %v388 = vld [vmem:[#allocation8 + $0x74] sm:$0xf]
    %v389 = vld [vmem:[#allocation8 + $0x78] sm:$0xf]
    %v390 = vld [vmem:[#allocation8 + $0x7c] sm:$0xf]
    %v391 = vld [vmem:[#allocation8 + $0x80] sm:$0xf]
    %v392 = vld [vmem:[#allocation8 + $0x84] sm:$0xf]
    %v393 = vld [vmem:[#allocation8 + $0x88] sm:$0xf]
    %v394 = vld [vmem:[#allocation8 + $0x8c] sm:$0xf]
    %v395 = vld [vmem:[#allocation8 + $0x90] sm:$0xf]
    %v396 = vld [vmem:[#allocation8 + $0x94] sm:$0xf]
    %v397 = vld [vmem:[#allocation8 + $0x98] sm:$0xf]
    %v398 = vld [vmem:[#allocation8 + $0x9c] sm:$0xf]
    %v399 = vld [vmem:[#allocation8 + $0xa0] sm:$0xf]
    %v400 = vld [vmem:[#allocation8 + $0xa4] sm:$0xf]
    %v401 = vld [vmem:[#allocation8 + $0xa8] sm:$0xf]
    %v402 = vld [vmem:[#allocation8 + $0xac] sm:$0xf]
    %v403 = vld [vmem:[#allocation8 + $0xb0] sm:$0xf]
    %v404 = vld [vmem:[#allocation8 + $0xb4] sm:$0xf]
    %v405 = vld [vmem:[#allocation8 + $0xb8] sm:$0xf]
    %v406 = vld [vmem:[#allocation8 + $0xbc] sm:$0xf]
    %v407 = vld [vmem:[%s4] sm:$0x1]
    %v409 = vlaneseq
    %v410 = vshrl.u32 %v409, 7
    %v411 = vsub.s32 0, %v410
    %v412 = vrot.slane %v407, %v411
    %v462 = vunpack.c.l.b16 %v359
    %v463 = vunpack.c.l.b16 %v360
    %v464 = vunpack.c.l.b16 %v361
    %v465 = vunpack.c.l.b16 %v362
    %v466 = vunpack.c.l.b16 %v363
    %v467 = vunpack.c.l.b16 %v364
    %v468 = vunpack.c.l.b16 %v365
    %v469 = vunpack.c.l.b16 %v366
    %v470 = vunpack.c.l.b16 %v367
    %v471 = vunpack.c.l.b16 %v368
    %v472 = vunpack.c.l.b16 %v369
    %v473 = vunpack.c.l.b16 %v370
    %v474 = vunpack.c.l.b16 %v371
    %v475 = vunpack.c.l.b16 %v372
    %v476 = vunpack.c.l.b16 %v373
    %v477 = vunpack.c.l.b16 %v374
    %v478 = vunpack.c.l.b16 %v375
    %v479 = vunpack.c.l.b16 %v376
    %v480 = vunpack.c.l.b16 %v377
    %v481 = vunpack.c.l.b16 %v378
    %v482 = vunpack.c.l.b16 %v379
    %v483 = vunpack.c.l.b16 %v380
    %v484 = vunpack.c.l.b16 %v381
    %v485 = vunpack.c.l.b16 %v382
    %v486 = vunpack.c.l.b16 %v383
    %v487 = vunpack.c.l.b16 %v384
    %v488 = vunpack.c.l.b16 %v385
    %v489 = vunpack.c.l.b16 %v386
    %v490 = vunpack.c.l.b16 %v387
    %v491 = vunpack.c.l.b16 %v388
    %v492 = vunpack.c.l.b16 %v389
    %v493 = vunpack.c.l.b16 %v390
    %v494 = vunpack.c.l.b16 %v391
    %v495 = vunpack.c.l.b16 %v392
    %v496 = vunpack.c.l.b16 %v393
    %v497 = vunpack.c.l.b16 %v394
    %v498 = vunpack.c.l.b16 %v395
    %v499 = vunpack.c.l.b16 %v396
    %v500 = vunpack.c.l.b16 %v397
    %v501 = vunpack.c.l.b16 %v398
    %v502 = vunpack.c.l.b16 %v399
    %v503 = vunpack.c.l.b16 %v400
    %v504 = vunpack.c.l.b16 %v401
    %v505 = vunpack.c.l.b16 %v402
    %v506 = vunpack.c.l.b16 %v403
    %v507 = vunpack.c.l.b16 %v404
    %v508 = vunpack.c.l.b16 %v405
    %v509 = vunpack.c.l.b16 %v406
    %v510 = vpack.c.b16 %v463, %v462
    %v511 = vpack.c.b16 %v465, %v464
    %v512 = vpack.c.b16 %v467, %v466
    %v513 = vpack.c.b16 %v469, %v468
    %v514 = vpack.c.b16 %v471, %v470
    %v515 = vpack.c.b16 %v473, %v472
    %v516 = vpack.c.b16 %v475, %v474
    %v517 = vpack.c.b16 %v477, %v476
    %v518 = vpack.c.b16 %v479, %v478
    %v519 = vpack.c.b16 %v481, %v480
    %v520 = vpack.c.b16 %v483, %v482
    %v521 = vpack.c.b16 %v485, %v484
    %v522 = vpack.c.b16 %v487, %v486
    %v523 = vpack.c.b16 %v489, %v488
    %v524 = vpack.c.b16 %v491, %v490
    %v525 = vpack.c.b16 %v493, %v492
    %v526 = vpack.c.b16 %v495, %v494
    %v527 = vpack.c.b16 %v497, %v496
    %v528 = vpack.c.b16 %v499, %v498
    %v529 = vpack.c.b16 %v501, %v500
    %v530 = vpack.c.b16 %v503, %v502
    %v531 = vpack.c.b16 %v505, %v504
    %v532 = vpack.c.b16 %v507, %v506
    %v533 = vpack.c.b16 %v509, %v508
    %558 = vmatprep.subr.bf16.mxu0 0
    %559 = vmatpush1.bf16.msra.mxu0 %v510
    %560 = vmatprep.subr.bf16.mxu0 0
    %561 = vmatpush1.bf16.msra.mxu0 %v511
    %562 = vmatprep.subr.bf16.mxu0 0
    %563 = vmatpush1.bf16.msra.mxu0 %v512
    %564 = vmatprep.subr.bf16.mxu0 0
    %565 = vmatpush1.bf16.msra.mxu0 %v513
    %566 = vmatprep.subr.bf16.mxu0 0
    %567 = vmatpush1.bf16.msra.mxu0 %v514
    %568 = vmatprep.subr.bf16.mxu0 0
    %569 = vmatpush1.bf16.msra.mxu0 %v515
    %570 = vmatprep.subr.bf16.mxu0 0
    %571 = vmatpush1.bf16.msra.mxu0 %v516
    %572 = vmatprep.subr.bf16.mxu0 0
    %573 = vmatpush1.bf16.msra.mxu0 %v517
    %574 = vmatprep.subr.bf16.mxu0 0
    %575 = vmatpush1.bf16.msra.mxu0 %v518
    %576 = vmatprep.subr.bf16.mxu0 0
    %577 = vmatpush1.bf16.msra.mxu0 %v519
    %578 = vmatprep.subr.bf16.mxu0 0
    %579 = vmatpush1.bf16.msra.mxu0 %v520
    %580 = vmatprep.subr.bf16.mxu0 0
    %581 = vmatpush1.bf16.msra.mxu0 %v521
    %582 = vmatprep.subr.bf16.mxu0 0
    %583 = vmatpush1.bf16.msra.mxu0 %v522
    %584 = vmatprep.subr.bf16.mxu0 0
    %585 = vmatpush1.bf16.msra.mxu0 %v523
    %586 = vmatprep.subr.bf16.mxu0 0
    %587 = vmatpush1.bf16.msra.mxu0 %v524
    %588 = vmatprep.subr.bf16.mxu0 0
    %589 = vmatpush1.bf16.msra.mxu0 %v525
    %590 = vmatprep.mubr.bf16.mxu0 %v340
    %591 = vmatmul.mubr.bf16.gmra.mrb[0].mxu0 %v324
    %v592 = vpop.f32.mrb[0].mxu0
    %v593 = vadd.f32 %v412, %v592
    %v594 = vpop.f32.mrb[0].mxu0
    %v595 = vpop.f32.mrb[0].mxu0
    %v596 = vadd.f32 %v412, %v595
    %v597 = vpop.f32.mrb[0].mxu0
    %598 = vmatprep.mubr.bf16.mxu0 %v343
    %599 = vmatmul.mubr.bf16.gmra.mrb[0].mxu0 %v325
    %v600 = vpop.f32.mrb[0].mxu0
    %v601 = vadd.f32 %v412, %v600
    %v602 = vpop.f32.mrb[0].mxu0
    %v603 = vpop.f32.mrb[0].mxu0
    %v604 = vadd.f32 %v412, %v603
    %v605 = vpop.f32.mrb[0].mxu0
    %606 = vdwg.mxu0
    %607 = vmatprep.subr.bf16.mxu0 0
    %608 = vmatpush1.bf16.msra.mxu0 %v526
    %609 = vmatprep.subr.bf16.mxu0 0
    %610 = vmatpush1.bf16.msra.mxu0 %v527
    %611 = vmatprep.subr.bf16.mxu0 0
    %612 = vmatpush1.bf16.msra.mxu0 %v528
    %613 = vmatprep.subr.bf16.mxu0 0
    %614 = vmatpush1.bf16.msra.mxu0 %v529
    %615 = vmatprep.subr.bf16.mxu0 0
    %616 = vmatpush1.bf16.msra.mxu0 %v530
    %617 = vmatprep.subr.bf16.mxu0 0
    %618 = vmatpush1.bf16.msra.mxu0 %v531
    %619 = vmatprep.subr.bf16.mxu0 0
    %620 = vmatpush1.bf16.msra.mxu0 %v532
    %621 = vmatprep.subr.bf16.mxu0 0
    %622 = vmatpush1.bf16.msra.mxu0 %v533
    %623 = vmatprep.subr.bf16.mxu0 0
    %624 = vmatpush1.bf16.msra.mxu0 0
    %625 = vmatprep.subr.bf16.mxu0 0
    %626 = vmatpush1.bf16.msra.mxu0 0
    %627 = vmatprep.subr.bf16.mxu0 0
    %628 = vmatpush1.bf16.msra.mxu0 0
    %629 = vmatprep.subr.bf16.mxu0 0
    %630 = vmatpush1.bf16.msra.mxu0 0
    %631 = vmatprep.subr.bf16.mxu0 0
    %632 = vmatpush1.bf16.msra.mxu0 0
    %633 = vmatprep.subr.bf16.mxu0 0
    %634 = vmatpush1.bf16.msra.mxu0 0
    %635 = vmatprep.subr.bf16.mxu0 0
    %636 = vmatpush1.bf16.msra.mxu0 0
    %637 = vmatprep.subr.bf16.mxu0 0
    %638 = vmatpush1.bf16.msra.mxu0 0
    %639 = vmatprep.mubr.bf16.mxu0 0
    %640 = vmatmul.mubr.bf16.gmra.mrb[0].mxu0 %v353
    %v641 = vpop.f32.mrb[0].mxu0
    %v642 = vadd.f32 %v593, %v641
    %v643 = vpop.f32.mrb[0].mxu0
    %v644 = vpop.f32.mrb[0].mxu0
    %v645 = vadd.f32 %v596, %v644
    %v646 = vpop.f32.mrb[0].mxu0
    %647 = vmatprep.mubr.bf16.mxu0 0
    %648 = vmatmul.mubr.bf16.gmra.mrb[0].mxu0 %v356
    %v649 = vpop.f32.mrb[0].mxu0
    %v650 = vadd.f32 %v601, %v649
    %v651 = vpop.f32.mrb[0].mxu0
    %v652 = vpop.f32.mrb[0].mxu0
    %v653 = vadd.f32 %v604, %v652
    %v654 = vpop.f32.mrb[0].mxu0
    %655 = vdwg.mxu0
    %vm656 = vcmp.gt.f32.partialorder %v642, 0.0
    %vm657 = vcmp.gt.f32.partialorder %v645, 0.0
    %vm658 = vcmp.gt.f32.partialorder %v650, 0.0
    %vm659 = vcmp.gt.f32.partialorder %v653, 0.0
    %v660 = vsel %vm656, 2.0, 1.01
    %v661 = vsel %vm657, 2.0, 1.01
    %v662 = vsel %vm658, 2.0, 1.01
    %v663 = vsel %vm659, 2.0, 1.01
    %v664 = vmul.f32 %v660, %v642
    %v665 = vmul.f32 %v661, %v645
    %v666 = vmul.f32 %v662, %v650
    %v667 = vmul.f32 %v663, %v653
    %v668 = vadd.f32 %v296, %v664
    %v669 = vadd.f32 %v297, %v665
    %v670 = vadd.f32 %v298, %v666
    %v671 = vadd.f32 %v299, %v667
    %672 = vst [vmem:[#allocation9] sm:$0xff] %v668
    %673 = vst [vmem:[#allocation9 + $0x8] sm:$0xff] %v669
    %674 = vst [vmem:[#allocation9 + $0x10] sm:$0xff] %v670
    %675 = vst [vmem:[#allocation9 + $0x18] sm:$0xff] %v671
    // Predicated region
    $region34: #{tpu_custom_call.1} parent=1 // pred_check
      _
    $region35: #{tpu_custom_call.1} parent=1 // pred_check_branch
      %677 = sbr.rel (0) target = $region37
    $region36: #{tpu_custom_call.1} parent=1 // pred_region
      %s679 = ssub.s32 512, 512
      %680 = vsyncadd [#allocation5], %s679
      %s681 = sshll.u32 [#allocation9], 4
      %s682 = int_to_ptr.vmem [resolvable:$true] %s681
      %687 = dma.vmem_to_hbm [thread:$0]  %s682, 512, %s5, [#allocation5], 128, 128, 8
    $region37: #{tpu_custom_call.1} parent=1 // pred_fallthru
      _
    // Predicated region
    $region38: #{tpu_custom_call.1} parent=1 // pred_check
      _
    $region39: #{tpu_custom_call.1} parent=1 // pred_check_branch
      %689 = sbr.rel (0) target = $region41
    $region40: #{tpu_custom_call.1} parent=1 // pred_region
      %690 = dma.done [#allocation5], 512
    $region41: #{tpu_custom_call.1} parent=1 // pred_fallthru
      _
    %691 = vsyncpa [#allocation4], 1
    %692 = vsyncpa [#allocation7], 1
    %693 = vsyncpa [#allocation5], 1

</llo_original>
